<compile_context>
chip_gen: v7x
topology: tpu7x:2x2x1
jax: 0.10.0
libtpu: 0.0.40
codegen_flags: <defaults>
</compile_context>

<pallas_src>
import functools

import jax
import jax.numpy as jnp
from jax.experimental import pallas as pl
from jax.experimental.pallas import tpu as pltpu

LANE = 128


def _round_up(n, m):
    return ((n + m - 1) // m) * m


def _pick_tile_m(n, target=512):
    """Row tile: ~`target` rows per step, even #steps >= 2 (v7x has 2 TCs)."""
    steps = max(2, pl.cdiv(n, target))
    steps += steps % 2            # even split across the two v7x TensorCores
    return _round_up(pl.cdiv(n, steps), 8)


def prepare_params(params, compute_dtype=jnp.bfloat16):
    """One-time weight packing — keep OUT of the per-call hot path.

    Layout: w1s = [Ws | W1] (shortcut columns first), padded to a multiple of
    128 lanes; W2 is placed on the matching rows so ReLU'd shortcut lanes hit
    zero rows; W3/b3 stay at the true output width.
    """
    w1, b1 = params["w1"], params["b1"]
    w2, b2 = params["w2"], params["b2"]
    w3, b3 = params["w3"], params["b3"]
    ws, bs = params["ws"], params["bs"]
    d_in, h1 = w1.shape
    h2 = w2.shape[1]
    d_out = w3.shape[1]
    f32 = jnp.float32

    w1s_width = _round_up(d_out + h1, LANE)     # 64 + 64 -> 128 at demo sizes
    h2_p = _round_up(h2, LANE)

    # [Ws | W1]: shortcut columns first -> sc is an offset-0 lane slice.
    w1s = (jnp.zeros((d_in, w1s_width), compute_dtype)
           .at[:, :d_out].set(ws.astype(compute_dtype))
           .at[:, d_out:d_out + h1].set(w1.astype(compute_dtype)))
    b1s = (jnp.zeros((1, w1s_width), f32)
           .at[:, :d_out].set(bs.astype(f32))
           .at[:, d_out:d_out + h1].set(b1.astype(f32)))
    # W2 consumes only the H1 lanes of ReLU(fused); all other rows are zero.
    w2p = (jnp.zeros((w1s_width, h2_p), compute_dtype)
           .at[d_out:d_out + h1, :h2].set(w2.astype(compute_dtype)))
    b2p = jnp.zeros((1, h2_p), f32).at[:, :h2].set(b2.astype(f32))
    # W3/b3 at TRUE output width: masked vst but half the write bytes and no
    # post-kernel slice pass.
    w3p = (jnp.zeros((h2_p, d_out), compute_dtype)
           .at[:h2, :].set(w3.astype(compute_dtype)))
    b3p = b3.reshape(1, d_out).astype(f32)

    return dict(w1s=w1s, b1s=b1s, w2=w2p, b2=b2p, w3=w3p, b3=b3p)


def ff_local_kernel(x_ref, w1s_ref, b1s_ref, w2_ref, b2_ref, w3_ref, b3_ref,
                    o_ref, *, sc_width):
    mxu_dtype = w1s_ref.dtype
    x = x_ref[...].astype(mxu_dtype)

    # Fused first stage: x @ [Ws | W1] + [bs | b1]  (one MXU pass over x).
    fused = jnp.dot(x, w1s_ref[...],
                    preferred_element_type=jnp.float32) + b1s_ref[...]
    sc = fused[:, :sc_width]          # linear shortcut, pre-ReLU, lanes 0..D_out

    # ReLU over ALL fused lanes: the shortcut lanes feed zero rows of W2p,
    # so activating them is harmless and avoids a lane mask.
    h = jnp.maximum(fused, 0.0)
    h = jnp.dot(h.astype(mxu_dtype), w2_ref[...],
                preferred_element_type=jnp.float32) + b2_ref[...]
    h = jnp.maximum(h, 0.0)
    h = jnp.dot(h.astype(mxu_dtype), w3_ref[...],
                preferred_element_type=jnp.float32) + b3_ref[...]
    h = jnp.maximum(h, 0.0)

    o_ref[...] = (h + sc).astype(o_ref.dtype)


def ff_local(x, packed, *, tile_m=None):
    """x: (N, D_in). packed: output of prepare_params()."""
    n, d_in = x.shape
    assert d_in == packed["w1s"].shape[0], "x feature dim != packed params"
    w1s_width = packed["w1s"].shape[1]
    h2_p = packed["w2"].shape[1]
    d_out = packed["w3"].shape[1]
    out_dtype = x.dtype

    if tile_m is None:
        tile_m = _pick_tile_m(n)
    grid = pl.cdiv(n, tile_m)
    n_pad = grid * tile_m
    x_p = x if n_pad == n else jnp.pad(x, ((0, n_pad - n), (0, 0)))

    inv = lambda shape: pl.BlockSpec(shape, lambda i: (0, 0))  # grid-invariant
    # TODO(synk): if hidden dims grow to 2k+, single-buffer the grid-invariant
    # weight specs (pipeline_mode=pl.Buffered(1)) or add a K grid axis with a
    # VMEM accumulator; this bites first on v7x (64 MiB VMEM, 32 MiB scoped
    # default). At these sizes all weights are < 200 KiB even double-buffered.

    out = pl.pallas_call(
        functools.partial(ff_local_kernel, sc_width=d_out),
        out_shape=jax.ShapeDtypeStruct((n_pad, d_out), out_dtype),
        grid_spec=pltpu.PrefetchScalarGridSpec(
            num_scalar_prefetch=0,
            grid=(grid,),
            in_specs=[
                pl.BlockSpec((tile_m, d_in), lambda i: (i, 0)),  # x (true width)
                inv((d_in, w1s_width)), inv((1, w1s_width)),     # [Ws|W1], [bs|b1]
                inv((w1s_width, h2_p)), inv((1, h2_p)),          # W2, b2
                inv((h2_p, d_out)), inv((1, d_out)),             # W3, b3
            ],
            out_specs=pl.BlockSpec((tile_m, d_out), lambda i: (i, 0)),
        ),
        compiler_params=pltpu.CompilerParams(
            dimension_semantics=("parallel",)),
    )(x_p, packed["w1s"], packed["b1s"], packed["w2"], packed["b2"],
      packed["w3"], packed["b3"])

    return out if n_pad == n else out[:n]


def init_params(key, input_dim, hidden1, hidden2, output, dtype=jnp.float32):
    """Deterministic synthetic init (Kaiming-uniform-like scaling)."""
    keys = jax.random.split(key, 8)

    def lin(kw, kb, fan_in, fan_out):
        bound = 1.0 / jnp.sqrt(fan_in)
        w = jax.random.uniform(kw, (fan_in, fan_out), dtype, -bound, bound)
        b = jax.random.uniform(kb, (1, fan_out), dtype, -bound, bound)
        return w, b

    w1, b1 = lin(keys[0], keys[1], input_dim, hidden1)
    w2, b2 = lin(keys[2], keys[3], hidden1, hidden2)
    w3, b3 = lin(keys[4], keys[5], hidden2, output)
    ws, bs = lin(keys[6], keys[7], input_dim, output)
    return dict(w1=w1, b1=b1, w2=w2, b2=b2, w3=w3, b3=b3, ws=ws, bs=bs)


def ff_local_ref(x, p):
    h = jnp.maximum(x @ p["w1"] + p["b1"], 0.0)
    h = jnp.maximum(h @ p["w2"] + p["b2"], 0.0)
    h = jnp.maximum(h @ p["w3"] + p["b3"], 0.0)
    return h + (x @ p["ws"] + p["bs"])


if __name__ == "__main__":
    key = jax.random.PRNGKey(0)
    k_x, k_p = jax.random.split(key)

    # Small shapes consistent with the module (args.FF_hidden1/2, FF_output).
    n, input_dim = 512, 32
    hidden1, hidden2, output = 64, 48, 64

    x = jax.random.normal(k_x, (n, input_dim), jnp.float32)
    params = init_params(k_p, input_dim, hidden1, hidden2, output)
    ref = ff_local_ref(x, params)

    # f32 MXU path: must match the f32 reference tightly.
    # (If bit-faithful f32 were required, add precision=lax.Precision.HIGHEST
    #  to the dots; default lowering already passes 1e-5 at these sizes.)
    packed_f32 = prepare_params(params, compute_dtype=jnp.float32)
    out_f32 = jax.block_until_ready(ff_local(x, packed_f32))
    assert out_f32.shape == (n, output)
    err_f32 = float(jnp.max(jnp.abs(out_f32 - ref)))
    assert jnp.allclose(out_f32, ref, atol=1e-5, rtol=1e-5), err_f32

    # Default bf16-MXU path (f32 accumulation): fast path on v5e/v6e/v7x.
    packed_bf16 = prepare_params(params)          # compute_dtype=bf16 default
    out_bf16 = jax.block_until_ready(ff_local(x, packed_bf16, tile_m=256))
    assert out_bf16.shape == (n, output)
    assert float(jnp.max(jnp.abs(out_bf16 - ref))) < 0.3

    # Ragged-N path: exercises row padding + even-grid auto tile selection.
    out_ragged = jax.block_until_ready(ff_local(x[:300], packed_bf16))
    assert out_ragged.shape == (300, output)
    assert float(jnp.max(jnp.abs(out_ragged - ref[:300]))) < 0.3

    print("KERNEL_OK")
</pallas_src>

<mosaic_0001>
module attributes {stable_mosaic.version = 11 : i64} {
  func.func @ff_local_kernel(%arg0: i32, %arg1: memref<256x32xf32, #tpu.memory_space<vmem>>, %arg2: memref<32x128xf32, #tpu.memory_space<vmem>>, %arg3: memref<1x128xf32, #tpu.memory_space<vmem>>, %arg4: memref<128x128xf32, #tpu.memory_space<vmem>>, %arg5: memref<1x128xf32, #tpu.memory_space<vmem>>, %arg6: memref<128x64xf32, #tpu.memory_space<vmem>>, %arg7: memref<1x64xf32, #tpu.memory_space<vmem>>, %arg8: memref<256x64xf32, #tpu.memory_space<vmem>>) attributes {dimension_semantics = [#tpu.dimension_semantics<parallel>], iteration_bounds = array<i64: 2>, scalar_prefetch = 0 : i64, scratch_operands = 0 : i64, tpu.core_type = #tpu.core_type<tc>, window_params = [{transform_indices = @transform_0, window_bounds = array<i64: 256, 32>}, {pipeline_mode = #tpu.pipeline_mode<synchronous>, transform_indices = @transform_1, window_bounds = array<i64: 32, 128>}, {pipeline_mode = #tpu.pipeline_mode<synchronous>, transform_indices = @transform_2, window_bounds = array<i64: 1, 128>}, {pipeline_mode = #tpu.pipeline_mode<synchronous>, transform_indices = @transform_3, window_bounds = array<i64: 128, 128>}, {pipeline_mode = #tpu.pipeline_mode<synchronous>, transform_indices = @transform_4, window_bounds = array<i64: 1, 128>}, {pipeline_mode = #tpu.pipeline_mode<synchronous>, transform_indices = @transform_5, window_bounds = array<i64: 128, 64>}, {pipeline_mode = #tpu.pipeline_mode<synchronous>, transform_indices = @transform_6, window_bounds = array<i64: 1, 64>}, {transform_indices = @transform_7, window_bounds = array<i64: 256, 64>}]} {
    %c0 = arith.constant 0 : index
    %c0_0 = arith.constant 0 : index
    %0 = vector.load %arg1[%c0, %c0_0] : memref<256x32xf32, #tpu.memory_space<vmem>>, vector<256x32xf32>
    %c0_1 = arith.constant 0 : index
    %c0_2 = arith.constant 0 : index
    %1 = vector.load %arg2[%c0_1, %c0_2] : memref<32x128xf32, #tpu.memory_space<vmem>>, vector<32x128xf32>
    %cst = arith.constant dense<0.000000e+00> : vector<256x128xf32>
    %2 = tpu.matmul %0, %1, %cst {dimension_numbers = #tpu.dot_dimension_numbers<[1], [0], [0], [1], [0, 0, 1, 1], [], []>} : vector<256x32xf32>, vector<32x128xf32>, vector<256x128xf32> -> vector<256x128xf32>
    %c0_3 = arith.constant 0 : index
    %c0_4 = arith.constant 0 : index
    %3 = vector.load %arg3[%c0_3, %c0_4] : memref<1x128xf32, #tpu.memory_space<vmem>>, vector<1x128xf32>
    %4 = vector.broadcast %3 : vector<1x128xf32> to vector<256x128xf32>
    %5 = arith.addf %2, %4 : vector<256x128xf32>
    %6 = vector.extract_strided_slice %5 {offsets = [0, 0], sizes = [256, 64], strides = [1, 1]} : vector<256x128xf32> to vector<256x64xf32>
    %cst_5 = arith.constant 0.000000e+00 : f32
    %7 = vector.broadcast %cst_5 : f32 to vector<256x128xf32>
    %8 = arith.maximumf %5, %7 : vector<256x128xf32>
    %c0_6 = arith.constant 0 : index
    %c0_7 = arith.constant 0 : index
    %9 = vector.load %arg4[%c0_6, %c0_7] : memref<128x128xf32, #tpu.memory_space<vmem>>, vector<128x128xf32>
    %cst_8 = arith.constant dense<0.000000e+00> : vector<256x128xf32>
    %10 = tpu.matmul %8, %9, %cst_8 {dimension_numbers = #tpu.dot_dimension_numbers<[1], [0], [0], [1], [0, 0, 1, 1], [], []>} : vector<256x128xf32>, vector<128x128xf32>, vector<256x128xf32> -> vector<256x128xf32>
    %c0_9 = arith.constant 0 : index
    %c0_10 = arith.constant 0 : index
    %11 = vector.load %arg5[%c0_9, %c0_10] : memref<1x128xf32, #tpu.memory_space<vmem>>, vector<1x128xf32>
    %12 = vector.broadcast %11 : vector<1x128xf32> to vector<256x128xf32>
    %13 = arith.addf %10, %12 : vector<256x128xf32>
    %cst_11 = arith.constant 0.000000e+00 : f32
    %14 = vector.broadcast %cst_11 : f32 to vector<256x128xf32>
    %15 = arith.maximumf %13, %14 : vector<256x128xf32>
    %c0_12 = arith.constant 0 : index
    %c0_13 = arith.constant 0 : index
    %16 = vector.load %arg6[%c0_12, %c0_13] : memref<128x64xf32, #tpu.memory_space<vmem>>, vector<128x64xf32>
    %cst_14 = arith.constant dense<0.000000e+00> : vector<256x64xf32>
    %17 = tpu.matmul %15, %16, %cst_14 {dimension_numbers = #tpu.dot_dimension_numbers<[1], [0], [0], [1], [0, 0, 1, 1], [], []>} : vector<256x128xf32>, vector<128x64xf32>, vector<256x64xf32> -> vector<256x64xf32>
    %c0_15 = arith.constant 0 : index
    %c0_16 = arith.constant 0 : index
    %18 = vector.load %arg7[%c0_15, %c0_16] : memref<1x64xf32, #tpu.memory_space<vmem>>, vector<1x64xf32>
    %19 = vector.broadcast %18 : vector<1x64xf32> to vector<256x64xf32>
    %20 = arith.addf %17, %19 : vector<256x64xf32>
    %cst_17 = arith.constant 0.000000e+00 : f32
    %21 = vector.broadcast %cst_17 : f32 to vector<256x64xf32>
    %22 = arith.maximumf %20, %21 : vector<256x64xf32>
    %23 = arith.addf %22, %6 : vector<256x64xf32>
    %c0_18 = arith.constant 0 : index
    %c0_19 = arith.constant 0 : index
    %24 = vector.load %arg8[%c0_18, %c0_19] : memref<256x64xf32, #tpu.memory_space<vmem>>, vector<256x64xf32>
    tpu.vector_store %arg8[%c0_18, %c0_19], %23 {strides = array<i32>} : memref<256x64xf32, #tpu.memory_space<vmem>>, vector<256x64xf32>,
    return
  }
  func.func @transform_0(%arg0: i32) -> (i32, i32) {
    %c0_i32 = arith.constant 0 : i32
    %c0_i32_0 = arith.constant 0 : i32
    return %arg0, %c0_i32 : i32, i32
  }
  func.func @transform_1(%arg0: i32) -> (i32, i32) {
    %c0_i32 = arith.constant 0 : i32
    %c0_i32_0 = arith.constant 0 : i32
    %c0_i32_1 = arith.constant 0 : i32
    return %c0_i32, %c0_i32_0 : i32, i32
  }
  func.func @transform_2(%arg0: i32) -> (i32, i32) {
    %c0_i32 = arith.constant 0 : i32
    %c0_i32_0 = arith.constant 0 : i32
    %c0_i32_1 = arith.constant 0 : i32
    return %c0_i32, %c0_i32_0 : i32, i32
  }
  func.func @transform_3(%arg0: i32) -> (i32, i32) {
    %c0_i32 = arith.constant 0 : i32
    %c0_i32_0 = arith.constant 0 : i32
    %c0_i32_1 = arith.constant 0 : i32
    return %c0_i32, %c0_i32_0 : i32, i32
  }
  func.func @transform_4(%arg0: i32) -> (i32, i32) {
    %c0_i32 = arith.constant 0 : i32
    %c0_i32_0 = arith.constant 0 : i32
    %c0_i32_1 = arith.constant 0 : i32
    return %c0_i32, %c0_i32_0 : i32, i32
  }
  func.func @transform_5(%arg0: i32) -> (i32, i32) {
    %c0_i32 = arith.constant 0 : i32
    %c0_i32_0 = arith.constant 0 : i32
    %c0_i32_1 = arith.constant 0 : i32
    return %c0_i32, %c0_i32_0 : i32, i32
  }
  func.func @transform_6(%arg0: i32) -> (i32, i32) {
    %c0_i32 = arith.constant 0 : i32
    %c0_i32_0 = arith.constant 0 : i32
    %c0_i32_1 = arith.constant 0 : i32
    return %c0_i32, %c0_i32_0 : i32, i32
  }
  func.func @transform_7(%arg0: i32) -> (i32, i32) {
    %c0_i32 = arith.constant 0 : i32
    %c0_i32_0 = arith.constant 0 : i32
    return %arg0, %c0_i32 : i32, i32
  }
}

</mosaic_0001>

<llo_original>
// kernel: tpu_custom_call.1
$region0: #{tpu_custom_call.1}
  #allocation0 [shape = 'u32[]', space=smem, size = 0x4, offset = 0x4, fixed_abs, tag = 'smem constant byte address 0x4 - core index']
  #allocation1 [shape = 'u32[144,128]{1,0:T(1,128)}', space=vmem, size = 0x12000, scoped, tag = 'internal scratch']
  %s0 = inlined_call_operand.vmem [shape: f32[512,32], index: 0, kind: input, shape index: {}]
  %s1 = inlined_call_operand.vmem [shape: f32[32,128], index: 1, kind: input, shape index: {}]
  %s2 = inlined_call_operand.vmem [shape: f32[1,128], index: 2, kind: input, shape index: {}]
  %s3 = inlined_call_operand.vmem [shape: f32[128,128], index: 3, kind: input, shape index: {}]
  %s4 = inlined_call_operand.vmem [shape: f32[1,128], index: 4, kind: input, shape index: {}]
  %s5 = inlined_call_operand.vmem [shape: f32[128,64], index: 5, kind: input, shape index: {}]
  %s6 = inlined_call_operand.vmem [shape: f32[1,64], index: 6, kind: input, shape index: {}]
  %s7 = inlined_call_operand.vmem [shape: f32[512,64], index: 7, kind: output, shape index: {}]
  %s8 = sld [smem:[#allocation0]]
  $region61: #{tpu_custom_call.1} parent=0
    _
  %s10 = ssub.s32 1, %s8
  %s11 = scalar_select 0, %s10, %s8
  loop: start=0, step=1, limit=4
  $region2: #{tpu_custom_call.1} parent=0 // loop_pre_header
    _
  $region3: #{tpu_custom_call.1} parent=0 // loop_header
    %s13 = sphi 0, %s17
    %p14 = scmp.ge.s32.totalorder %s13, 4
    %s23 = sphi 0, %s25
    %s26 = sphi 0, %s23
    %s27 = sphi 0, %s26
    %s43 = sphi 0, %s27
    %s47 = sphi 0, %s47
    %s49 = sphi 0, %s47
    %s50 = sphi 0, %s49
    %s64 = sphi 0, %s50
    %s68 = sphi 0, %s68
    %s70 = sphi 0, %s68
    %s71 = sphi 0, %s70
    %s85 = sphi 0, %s71
    %s89 = sphi 0, %s89
    %s91 = sphi 0, %s89
    %s92 = sphi 0, %s91
    %s106 = sphi 0, %s92
    %s110 = sphi 0, %s110
    %s112 = sphi 0, %s110
    %s113 = sphi 0, %s112
    %s127 = sphi 0, %s113
    %s131 = sphi 0, %s131
    %s133 = sphi 0, %s131
    %s134 = sphi 0, %s133
    %s148 = sphi 0, %s134
    %s152 = sphi 0, %s152
    %s154 = sphi 0, %s152
    %s155 = sphi 0, %s154
    %s169 = sphi 0, %s155
    %s175 = sphi 0, %s177
    %s178 = sphi 0, %s175
    %s179 = sphi 0, %s178
    %s195 = sphi 0, %s179
  $region4: #{tpu_custom_call.1} parent=0 // loop_header_branch
    %16 = sbr.rel (%p14) target = $region8
  $region5: #{tpu_custom_call.1} parent=0 // loop_body
    %s18 = ssub.s32 %s13, 1
    %s19 = ssub.s32 %s13, 2
    %s20 = sadd.s32 %s13, 1
    %s21 = ssub.s32 %s13, %s20
    %p22 = scmp.eq.s32.totalorder %s21, 0
    %s24 = sadd.s32 %s23, 1
    %s25 = scalar_select %p22, %s23, %s24
    %p28 = pneg %p22
    %p29 = scmp.eq.s32.totalorder %s13, 1
    %p30 = por %p28, %p29
    %p31 = scmp.ne.s32.totalorder %s23, %s26
    %p32 = scmp.eq.s32.totalorder %s13, 0
    %p33 = por %p31, %p32
    %p34 = scmp.ne.s32.totalorder %s23, %s26
    %p35 = scmp.eq.s32.totalorder %s18, 1
    %p36 = por %p34, %p35
    %p37 = scmp.ne.s32.totalorder %s26, %s27
    %p38 = scmp.eq.s32.totalorder %s18, 0
    %p39 = por %p37, %p38
    %p40 = scmp.ne.s32.totalorder %s26, %s27
    %p41 = scmp.eq.s32.totalorder %s19, 1
    %p42 = por %p40, %p41
    %p44 = scmp.ne.s32.totalorder %s27, %s43
    %p45 = scmp.eq.s32.totalorder %s19, 0
    %p46 = por %p44, %p45
    %s48 = sadd.s32 %s47, 1
    %p51 = scmp.eq.s32.totalorder %s13, 1
    %p52 = scmp.ne.s32.totalorder %s47, %s49
    %p53 = scmp.eq.s32.totalorder %s13, 0
    %p54 = por %p52, %p53
    %p55 = scmp.ne.s32.totalorder %s47, %s49
    %p56 = scmp.eq.s32.totalorder %s18, 1
    %p57 = por %p55, %p56
    %p58 = scmp.ne.s32.totalorder %s49, %s50
    %p59 = scmp.eq.s32.totalorder %s18, 0
    %p60 = por %p58, %p59
    %p61 = scmp.ne.s32.totalorder %s49, %s50
    %p62 = scmp.eq.s32.totalorder %s19, 1
    %p63 = por %p61, %p62
    %p65 = scmp.ne.s32.totalorder %s50, %s64
    %p66 = scmp.eq.s32.totalorder %s19, 0
    %p67 = por %p65, %p66
    %s69 = sadd.s32 %s68, 1
    %p72 = scmp.eq.s32.totalorder %s13, 1
    %p73 = scmp.ne.s32.totalorder %s68, %s70
    %p74 = scmp.eq.s32.totalorder %s13, 0
    %p75 = por %p73, %p74
    %p76 = scmp.ne.s32.totalorder %s68, %s70
    %p77 = scmp.eq.s32.totalorder %s18, 1
    %p78 = por %p76, %p77
    %p79 = scmp.ne.s32.totalorder %s70, %s71
    %p80 = scmp.eq.s32.totalorder %s18, 0
    %p81 = por %p79, %p80
    %p82 = scmp.ne.s32.totalorder %s70, %s71
    %p83 = scmp.eq.s32.totalorder %s19, 1
    %p84 = por %p82, %p83
    %p86 = scmp.ne.s32.totalorder %s71, %s85
    %p87 = scmp.eq.s32.totalorder %s19, 0
    %p88 = por %p86, %p87
    %s90 = sadd.s32 %s89, 1
    %p93 = scmp.eq.s32.totalorder %s13, 1
    %p94 = scmp.ne.s32.totalorder %s89, %s91
    %p95 = scmp.eq.s32.totalorder %s13, 0
    %p96 = por %p94, %p95
    %p97 = scmp.ne.s32.totalorder %s89, %s91
    %p98 = scmp.eq.s32.totalorder %s18, 1
    %p99 = por %p97, %p98
    %p100 = scmp.ne.s32.totalorder %s91, %s92
    %p101 = scmp.eq.s32.totalorder %s18, 0
    %p102 = por %p100, %p101
    %p103 = scmp.ne.s32.totalorder %s91, %s92
    %p104 = scmp.eq.s32.totalorder %s19, 1
    %p105 = por %p103, %p104
    %p107 = scmp.ne.s32.totalorder %s92, %s106
    %p108 = scmp.eq.s32.totalorder %s19, 0
    %p109 = por %p107, %p108
    %s111 = sadd.s32 %s110, 1
    %p114 = scmp.eq.s32.totalorder %s13, 1
    %p115 = scmp.ne.s32.totalorder %s110, %s112
    %p116 = scmp.eq.s32.totalorder %s13, 0
    %p117 = por %p115, %p116
    %p118 = scmp.ne.s32.totalorder %s110, %s112
    %p119 = scmp.eq.s32.totalorder %s18, 1
    %p120 = por %p118, %p119
    %p121 = scmp.ne.s32.totalorder %s112, %s113
    %p122 = scmp.eq.s32.totalorder %s18, 0
    %p123 = por %p121, %p122
    %p124 = scmp.ne.s32.totalorder %s112, %s113
    %p125 = scmp.eq.s32.totalorder %s19, 1
    %p126 = por %p124, %p125
    %p128 = scmp.ne.s32.totalorder %s113, %s127
    %p129 = scmp.eq.s32.totalorder %s19, 0
    %p130 = por %p128, %p129
    %s132 = sadd.s32 %s131, 1
    %p135 = scmp.eq.s32.totalorder %s13, 1
    %p136 = scmp.ne.s32.totalorder %s131, %s133
    %p137 = scmp.eq.s32.totalorder %s13, 0
    %p138 = por %p136, %p137
    %p139 = scmp.ne.s32.totalorder %s131, %s133
    %p140 = scmp.eq.s32.totalorder %s18, 1
    %p141 = por %p139, %p140
    %p142 = scmp.ne.s32.totalorder %s133, %s134
    %p143 = scmp.eq.s32.totalorder %s18, 0
    %p144 = por %p142, %p143
    %p145 = scmp.ne.s32.totalorder %s133, %s134
    %p146 = scmp.eq.s32.totalorder %s19, 1
    %p147 = por %p145, %p146
    %p149 = scmp.ne.s32.totalorder %s134, %s148
    %p150 = scmp.eq.s32.totalorder %s19, 0
    %p151 = por %p149, %p150
    %s153 = sadd.s32 %s152, 1
    %p156 = scmp.eq.s32.totalorder %s13, 1
    %p157 = scmp.ne.s32.totalorder %s152, %s154
    %p158 = scmp.eq.s32.totalorder %s13, 0
    %p159 = por %p157, %p158
    %p160 = scmp.ne.s32.totalorder %s152, %s154
    %p161 = scmp.eq.s32.totalorder %s18, 1
    %p162 = por %p160, %p161
    %p163 = scmp.ne.s32.totalorder %s154, %s155
    %p164 = scmp.eq.s32.totalorder %s18, 0
    %p165 = por %p163, %p164
    %p166 = scmp.ne.s32.totalorder %s154, %s155
    %p167 = scmp.eq.s32.totalorder %s19, 1
    %p168 = por %p166, %p167
    %p170 = scmp.ne.s32.totalorder %s155, %s169
    %p171 = scmp.eq.s32.totalorder %s19, 0
    %p172 = por %p170, %p171
    %s173 = ssub.s32 %s13, %s20
    %p174 = scmp.eq.s32.totalorder %s173, 0
    %s176 = sadd.s32 %s175, 1
    %s177 = scalar_select %p174, %s175, %s176
    %p180 = pneg %p174
    %p181 = scmp.eq.s32.totalorder %s13, 1
    %p182 = por %p180, %p181
    %p183 = scmp.ne.s32.totalorder %s175, %s178
    %p184 = scmp.eq.s32.totalorder %s13, 0
    %p185 = por %p183, %p184
    %p186 = scmp.ne.s32.totalorder %s175, %s178
    %p187 = scmp.eq.s32.totalorder %s18, 1
    %p188 = por %p186, %p187
    %p189 = scmp.ne.s32.totalorder %s178, %s179
    %p190 = scmp.eq.s32.totalorder %s18, 0
    %p191 = por %p189, %p190
    %p192 = scmp.ne.s32.totalorder %s178, %s179
    %p193 = scmp.eq.s32.totalorder %s19, 1
    %p194 = por %p192, %p193
    %p196 = scmp.ne.s32.totalorder %s179, %s195
    %p197 = scmp.eq.s32.totalorder %s19, 0
    %p198 = por %p196, %p197
    %p199 = scmp.le.s32.totalorder 1, %s13
    %p200 = scmp.lt.s32.totalorder %s13, 3
    %p201 = pnand %p199, %p200
    %p202 = pneg %p201
    // Predicated region
    $region9: #{tpu_custom_call.1} parent=5 // pred_check
      _
    $region10: #{tpu_custom_call.1} parent=5 // pred_check_branch
      %204 = sbr.rel (%p201) target = $region12
    $region11: #{tpu_custom_call.1} parent=5 // pred_region
      %s205 = ssub.s32 %s13, 1
      // Predicated region
      $region13: #{tpu_custom_call.1} parent=11 // pred_check
        %p206 = pneg %p60
      $region14: #{tpu_custom_call.1} parent=11 // pred_check_branch
        %208 = sbr.rel (%p206) target = $region16
      $region15: #{tpu_custom_call.1} parent=11 // pred_region
        _
      $region16: #{tpu_custom_call.1} parent=11 // pred_fallthru
        _
      // Predicated region
      $region17: #{tpu_custom_call.1} parent=11 // pred_check
        %p209 = pneg %p81
      $region18: #{tpu_custom_call.1} parent=11 // pred_check_branch
        %211 = sbr.rel (%p209) target = $region20
      $region19: #{tpu_custom_call.1} parent=11 // pred_region
        _
      $region20: #{tpu_custom_call.1} parent=11 // pred_fallthru
        _
      // Predicated region
      $region21: #{tpu_custom_call.1} parent=11 // pred_check
        %p212 = pneg %p102
      $region22: #{tpu_custom_call.1} parent=11 // pred_check_branch
        %214 = sbr.rel (%p212) target = $region24
      $region23: #{tpu_custom_call.1} parent=11 // pred_region
        _
      $region24: #{tpu_custom_call.1} parent=11 // pred_fallthru
        _
      // Predicated region
      $region25: #{tpu_custom_call.1} parent=11 // pred_check
        %p215 = pneg %p123
      $region26: #{tpu_custom_call.1} parent=11 // pred_check_branch
        %217 = sbr.rel (%p215) target = $region28
      $region27: #{tpu_custom_call.1} parent=11 // pred_region
        _
      $region28: #{tpu_custom_call.1} parent=11 // pred_fallthru
        _
      // Predicated region
      $region29: #{tpu_custom_call.1} parent=11 // pred_check
        %p218 = pneg %p144
      $region30: #{tpu_custom_call.1} parent=11 // pred_check_branch
        %220 = sbr.rel (%p218) target = $region32
      $region31: #{tpu_custom_call.1} parent=11 // pred_region
        _
      $region32: #{tpu_custom_call.1} parent=11 // pred_fallthru
        _
      // Predicated region
      $region33: #{tpu_custom_call.1} parent=11 // pred_check
        %p221 = pneg %p165
      $region34: #{tpu_custom_call.1} parent=11 // pred_check_branch
        %223 = sbr.rel (%p221) target = $region36
      $region35: #{tpu_custom_call.1} parent=11 // pred_region
        _
      $region36: #{tpu_custom_call.1} parent=11 // pred_fallthru
        _
    $region12: #{tpu_custom_call.1} parent=5 // pred_fallthru
      _
    %p224 = scmp.lt.s32.totalorder %s13, 2
    // Predicated region
    $region37: #{tpu_custom_call.1} parent=5 // pred_check
      %p225 = pneg %p224
    $region38: #{tpu_custom_call.1} parent=5 // pred_check_branch
      %227 = sbr.rel (%p225) target = $region40
    $region39: #{tpu_custom_call.1} parent=5 // pred_region
      // Predicated region
      $region41: #{tpu_custom_call.1} parent=39 // pred_check
        %p228 = pneg %p33
      $region42: #{tpu_custom_call.1} parent=39 // pred_check_branch
        %230 = sbr.rel (%p228) target = $region44
      $region43: #{tpu_custom_call.1} parent=39 // pred_region
        %s231 = smul.u32 32, %s13
        %p232 = scmp.lt.s32.totalorder %s231, 63
        %s233 = scalar_select %p232, %s231, 63
        %s234 = smul.addr %s233, 8
        %s235 = scalar_lea.vmem %s0, %s234
        %s236 = smul.u32 32, %s13
      $region44: #{tpu_custom_call.1} parent=39 // pred_fallthru
        _
    $region40: #{tpu_custom_call.1} parent=5 // pred_fallthru
      _
    %p237 = scmp.le.s32.totalorder 1, %s13
    %p238 = scmp.lt.s32.totalorder %s13, 3
    %p239 = pnand %p237, %p238
    %p240 = pneg %p239
    // Predicated region
    $region45: #{tpu_custom_call.1} parent=5 // pred_check
      _
    $region46: #{tpu_custom_call.1} parent=5 // pred_check_branch
      %242 = sbr.rel (%p239) target = $region48
    $region47: #{tpu_custom_call.1} parent=5 // pred_region
      %s243 = ssub.s32 %s13, 1
      %s244 = smul.u32 32, %s18
      %p245 = scmp.lt.s32.totalorder %s244, 63
      %s246 = scalar_select %p245, %s244, 63
      %s247 = smul.addr %s246, 8
      %s248 = scalar_lea.vmem %s0, %s247
      %p249 = pneg %p39
      %p250 = pneg %p36
      %p251 = pneg %p60
      %p252 = pneg %p57
      %p253 = pneg %p81
      %p254 = pneg %p78
      %p255 = pneg %p102
      %p256 = pneg %p99
      %p257 = pneg %p123
      %p258 = pneg %p120
      %p259 = pneg %p144
      %p260 = pneg %p141
      %p261 = pneg %p165
      %p262 = pneg %p162
      %p263 = pneg %p191
      %p264 = pneg %p188
      %s265 = smul.u32 32, %s18
      %p266 = scmp.lt.s32.totalorder %s265, 63
      %s267 = scalar_select %p266, %s265, 63
      %s268 = smul.addr %s267, 8
      %s269 = scalar_lea.vmem %s7, %s268
      %s270 = smul.u32 32, %s18
      %p271 = scmp.lt.s32.totalorder %s270, 63
      %s272 = scalar_select %p271, %s270, 63
      %s273 = smul.addr %s272, 8
      %s274 = scalar_lea.vmem %s0, %s273
      %s275 = smul.u32 32, %s18
      %s276 = smul.u32 32, %s18
      %p277 = scmp.lt.s32.totalorder %s276, 63
      %s278 = scalar_select %p277, %s276, 63
      %s279 = smul.addr %s278, 8
      %s280 = scalar_lea.vmem %s7, %s279
      %s281 = smul.u32 32, %s18
      %v282 = vld [vmem:[%s274] sm:$0xff]
      %v283 = vld [vmem:[%s274 + $0x8] sm:$0xff]
      %v284 = vld [vmem:[%s274 + $0x10] sm:$0xff]
      %v285 = vld [vmem:[%s274 + $0x18] sm:$0xff]
      %v286 = vld [vmem:[%s274 + $0x20] sm:$0xff]
      %v287 = vld [vmem:[%s274 + $0x28] sm:$0xff]
      %v288 = vld [vmem:[%s274 + $0x30] sm:$0xff]
      %v289 = vld [vmem:[%s274 + $0x38] sm:$0xff]
      %v290 = vld [vmem:[%s274 + $0x40] sm:$0xff]
      %v291 = vld [vmem:[%s274 + $0x48] sm:$0xff]
      %v292 = vld [vmem:[%s274 + $0x50] sm:$0xff]
      %v293 = vld [vmem:[%s274 + $0x58] sm:$0xff]
      %v294 = vld [vmem:[%s274 + $0x60] sm:$0xff]
      %v295 = vld [vmem:[%s274 + $0x68] sm:$0xff]
      %v296 = vld [vmem:[%s274 + $0x70] sm:$0xff]
      %v297 = vld [vmem:[%s274 + $0x78] sm:$0xff]
      %v298 = vld [vmem:[%s274 + $0x80] sm:$0xff]
      %v299 = vld [vmem:[%s274 + $0x88] sm:$0xff]
      %v300 = vld [vmem:[%s274 + $0x90] sm:$0xff]
      %v301 = vld [vmem:[%s274 + $0x98] sm:$0xff]
      %v302 = vld [vmem:[%s274 + $0xa0] sm:$0xff]
      %v303 = vld [vmem:[%s274 + $0xa8] sm:$0xff]
      %v304 = vld [vmem:[%s274 + $0xb0] sm:$0xff]
      %v305 = vld [vmem:[%s274 + $0xb8] sm:$0xff]
      %v306 = vld [vmem:[%s274 + $0xc0] sm:$0xff]
      %v307 = vld [vmem:[%s274 + $0xc8] sm:$0xff]
      %v308 = vld [vmem:[%s274 + $0xd0] sm:$0xff]
      %v309 = vld [vmem:[%s274 + $0xd8] sm:$0xff]
      %v310 = vld [vmem:[%s274 + $0xe0] sm:$0xff]
      %v311 = vld [vmem:[%s274 + $0xe8] sm:$0xff]
      %v312 = vld [vmem:[%s274 + $0xf0] sm:$0xff]
      %v313 = vld [vmem:[%s274 + $0xf8] sm:$0xff]
      %v314 = vld [vmem:[%s1] sm:$0xff]
      %v315 = vld [vmem:[%s1 + $0x8] sm:$0xff]
      %v316 = vld [vmem:[%s1 + $0x10] sm:$0xff]
      %v317 = vld [vmem:[%s1 + $0x18] sm:$0xff]
      %v318 = vld [vmem:[%s2] sm:$0x1]
      %v320 = vlaneseq
      %v321 = vshrl.u32 %v320, 7
      %v322 = vsub.s32 0, %v321
      %v323 = vrot.slane %v318, %v322
      %vm325 = vcmask 261120
      %v327 = vsel %vm325, %v282, 0
      %v330 = vsel %vm325, %v283, 0
      %v333 = vsel %vm325, %v284, 0
      %v336 = vsel %vm325, %v285, 0
      %v339 = vsel %vm325, %v286, 0
      %v342 = vsel %vm325, %v287, 0
      %v345 = vsel %vm325, %v288, 0
      %v348 = vsel %vm325, %v289, 0
      %v351 = vsel %vm325, %v290, 0
      %v354 = vsel %vm325, %v291, 0
      %v357 = vsel %vm325, %v292, 0
      %v360 = vsel %vm325, %v293, 0
      %v363 = vsel %vm325, %v294, 0
      %v366 = vsel %vm325, %v295, 0
      %v369 = vsel %vm325, %v296, 0
      %v372 = vsel %vm325, %v297, 0
      %v375 = vsel %vm325, %v298, 0
      %v378 = vsel %vm325, %v299, 0
      %v381 = vsel %vm325, %v300, 0
      %v384 = vsel %vm325, %v301, 0
      %v387 = vsel %vm325, %v302, 0
      %v390 = vsel %vm325, %v303, 0
      %v393 = vsel %vm325, %v304, 0
      %v396 = vsel %vm325, %v305, 0
      %v399 = vsel %vm325, %v306, 0
      %v402 = vsel %vm325, %v307, 0
      %v405 = vsel %vm325, %v308, 0
      %v408 = vsel %vm325, %v309, 0
      %v411 = vsel %vm325, %v310, 0
      %v414 = vsel %vm325, %v311, 0
      %v417 = vsel %vm325, %v312, 0
      %v420 = vsel %vm325, %v313, 0
      %422 = vmatprep.subr.mxu0 0.0
      %423 = vmatpush1.msra.mxu0 %v314
      %424 = vmatprep.subr.mxu0 0.0
      %425 = vmatpush1.msra.mxu0 %v315
      %426 = vmatprep.subr.mxu0 0.0
      %427 = vmatpush1.msra.mxu0 %v316
      %428 = vmatprep.subr.mxu0 0.0
      %429 = vmatpush1.msra.mxu0 %v317
      %430 = vmatprep.subr.mxu0 0.0
      %431 = vmatpush1.msra.mxu0 0.0
      %432 = vmatprep.subr.mxu0 0.0
      %433 = vmatpush1.msra.mxu0 0.0
      %434 = vmatprep.subr.mxu0 0.0
      %435 = vmatpush1.msra.mxu0 0.0
      %436 = vmatprep.subr.mxu0 0.0
      %437 = vmatpush1.msra.mxu0 0.0
      %438 = vmatprep.subr.mxu0 0.0
      %439 = vmatpush1.msra.mxu0 0.0
      %440 = vmatprep.subr.mxu0 0.0
      %441 = vmatpush1.msra.mxu0 0.0
      %442 = vmatprep.subr.mxu0 0.0
      %443 = vmatpush1.msra.mxu0 0.0
      %444 = vmatprep.subr.mxu0 0.0
      %445 = vmatpush1.msra.mxu0 0.0
      %446 = vmatprep.subr.mxu0 0.0
      %447 = vmatpush1.msra.mxu0 0.0
      %448 = vmatprep.subr.mxu0 0.0
      %449 = vmatpush1.msra.mxu0 0.0
      %450 = vmatprep.subr.mxu0 0.0
      %451 = vmatpush1.msra.mxu0 0.0
      %452 = vmatprep.subr.mxu0 0.0
      %453 = vmatpush1.msra.mxu0 0.0
      %454 = vmatprep.subr.mxu0 0.0
      %455 = vmatpush1.msra.mxu0 0.0
      %456 = vmatprep.subr.mxu0 0.0
      %457 = vmatpush1.msra.mxu0 0.0
      %458 = vmatprep.subr.mxu0 0.0
      %459 = vmatpush1.msra.mxu0 0.0
      %460 = vmatprep.subr.mxu0 0.0
      %461 = vmatpush1.msra.mxu0 0.0
      %462 = vmatprep.subr.mxu0 0.0
      %463 = vmatpush1.msra.mxu0 0.0
      %464 = vmatprep.subr.mxu0 0.0
      %465 = vmatpush1.msra.mxu0 0.0
      %466 = vmatprep.subr.mxu0 0.0
      %467 = vmatpush1.msra.mxu0 0.0
      %468 = vmatprep.subr.mxu0 0.0
      %469 = vmatpush1.msra.mxu0 0.0
      %470 = vmatprep.subr.mxu0 0.0
      %471 = vmatpush1.msra.mxu0 0.0
      %472 = vmatprep.subr.mxu0 0.0
      %473 = vmatpush1.msra.mxu0 0.0
      %474 = vmatprep.subr.mxu0 0.0
      %475 = vmatpush1.msra.mxu0 0.0
      %476 = vmatprep.subr.mxu0 0.0
      %477 = vmatpush1.msra.mxu0 0.0
      %478 = vmatprep.subr.mxu0 0.0
      %479 = vmatpush1.msra.mxu0 0.0
      %480 = vmatprep.subr.mxu0 0.0
      %481 = vmatpush1.msra.mxu0 0.0
      %482 = vmatprep.subr.mxu0 0.0
      %483 = vmatpush1.msra.mxu0 0.0
      %484 = vmatprep.subr.mxu0 0.0
      %485 = vmatpush1.msra.mxu0 0.0
      %486 = vmatprep.mubr.f32.mxu0 0.0
      %487 = vmatmul.mubr.f32.gmra.mrb[0].mxu0 %v327
      %v488 = vpop.f32.mrb[0].mxu0
      %v489 = vadd.f32 %v323, %v488
      %v490 = vpop.f32.mrb[0].mxu0
      %491 = vmatprep.mubr.f32.mxu0 0.0
      %492 = vmatmul.mubr.f32.gmra.mrb[0].mxu0 %v330
      %v493 = vpop.f32.mrb[0].mxu0
      %v494 = vadd.f32 %v323, %v493
      %v495 = vpop.f32.mrb[0].mxu0
      %496 = vmatprep.mubr.f32.mxu0 0.0
      %497 = vmatmul.mubr.f32.gmra.mrb[0].mxu0 %v333
      %v498 = vpop.f32.mrb[0].mxu0
      %v499 = vadd.f32 %v323, %v498
      %v500 = vpop.f32.mrb[0].mxu0
      %501 = vmatprep.mubr.f32.mxu0 0.0
      %502 = vmatmul.mubr.f32.gmra.mrb[0].mxu0 %v336
      %v503 = vpop.f32.mrb[0].mxu0
      %v504 = vadd.f32 %v323, %v503
      %v505 = vpop.f32.mrb[0].mxu0
      %506 = vmatprep.mubr.f32.mxu0 0.0
      %507 = vmatmul.mubr.f32.gmra.mrb[0].mxu0 %v339
      %v508 = vpop.f32.mrb[0].mxu0
      %v509 = vadd.f32 %v323, %v508
      %v510 = vpop.f32.mrb[0].mxu0
      %511 = vmatprep.mubr.f32.mxu0 0.0
      %512 = vmatmul.mubr.f32.gmra.mrb[0].mxu0 %v342
      %v513 = vpop.f32.mrb[0].mxu0
      %v514 = vadd.f32 %v323, %v513
      %v515 = vpop.f32.mrb[0].mxu0
      %516 = vmatprep.mubr.f32.mxu0 0.0
      %517 = vmatmul.mubr.f32.gmra.mrb[0].mxu0 %v345
      %v518 = vpop.f32.mrb[0].mxu0
      %v519 = vadd.f32 %v323, %v518
      %v520 = vpop.f32.mrb[0].mxu0
      %521 = vmatprep.mubr.f32.mxu0 0.0
      %522 = vmatmul.mubr.f32.gmra.mrb[0].mxu0 %v348
      %v523 = vpop.f32.mrb[0].mxu0
      %v524 = vadd.f32 %v323, %v523
      %v525 = vpop.f32.mrb[0].mxu0
      %526 = vmatprep.mubr.f32.mxu0 0.0
      %527 = vmatmul.mubr.f32.gmra.mrb[0].mxu0 %v351
      %v528 = vpop.f32.mrb[0].mxu0
      %v529 = vadd.f32 %v323, %v528
      %v530 = vpop.f32.mrb[0].mxu0
      %531 = vmatprep.mubr.f32.mxu0 0.0
      %532 = vmatmul.mubr.f32.gmra.mrb[0].mxu0 %v354
      %v533 = vpop.f32.mrb[0].mxu0
      %v534 = vadd.f32 %v323, %v533
      %v535 = vpop.f32.mrb[0].mxu0
      %536 = vmatprep.mubr.f32.mxu0 0.0
      %537 = vmatmul.mubr.f32.gmra.mrb[0].mxu0 %v357
      %v538 = vpop.f32.mrb[0].mxu0
      %v539 = vadd.f32 %v323, %v538
      %v540 = vpop.f32.mrb[0].mxu0
      %541 = vmatprep.mubr.f32.mxu0 0.0
      %542 = vmatmul.mubr.f32.gmra.mrb[0].mxu0 %v360
      %v543 = vpop.f32.mrb[0].mxu0
      %v544 = vadd.f32 %v323, %v543
      %v545 = vpop.f32.mrb[0].mxu0
      %546 = vmatprep.mubr.f32.mxu0 0.0
      %547 = vmatmul.mubr.f32.gmra.mrb[0].mxu0 %v363
      %v548 = vpop.f32.mrb[0].mxu0
      %v549 = vadd.f32 %v323, %v548
      %v550 = vpop.f32.mrb[0].mxu0
      %551 = vmatprep.mubr.f32.mxu0 0.0
      %552 = vmatmul.mubr.f32.gmra.mrb[0].mxu0 %v366
      %v553 = vpop.f32.mrb[0].mxu0
      %v554 = vadd.f32 %v323, %v553
      %v555 = vpop.f32.mrb[0].mxu0
      %556 = vmatprep.mubr.f32.mxu0 0.0
      %557 = vmatmul.mubr.f32.gmra.mrb[0].mxu0 %v369
      %v558 = vpop.f32.mrb[0].mxu0
      %v559 = vadd.f32 %v323, %v558
      %v560 = vpop.f32.mrb[0].mxu0
      %561 = vmatprep.mubr.f32.mxu0 0.0
      %562 = vmatmul.mubr.f32.gmra.mrb[0].mxu0 %v372
      %v563 = vpop.f32.mrb[0].mxu0
      %v564 = vadd.f32 %v323, %v563
      %v565 = vpop.f32.mrb[0].mxu0
      %566 = vmatprep.mubr.f32.mxu0 0.0
      %567 = vmatmul.mubr.f32.gmra.mrb[0].mxu0 %v375
      %v568 = vpop.f32.mrb[0].mxu0
      %v569 = vadd.f32 %v323, %v568
      %v570 = vpop.f32.mrb[0].mxu0
      %571 = vmatprep.mubr.f32.mxu0 0.0
      %572 = vmatmul.mubr.f32.gmra.mrb[0].mxu0 %v378
      %v573 = vpop.f32.mrb[0].mxu0
      %v574 = vadd.f32 %v323, %v573
      %v575 = vpop.f32.mrb[0].mxu0
      %576 = vmatprep.mubr.f32.mxu0 0.0
      %577 = vmatmul.mubr.f32.gmra.mrb[0].mxu0 %v381
      %v578 = vpop.f32.mrb[0].mxu0
      %v579 = vadd.f32 %v323, %v578
      %v580 = vpop.f32.mrb[0].mxu0
      %581 = vmatprep.mubr.f32.mxu0 0.0
      %582 = vmatmul.mubr.f32.gmra.mrb[0].mxu0 %v384
      %v583 = vpop.f32.mrb[0].mxu0
      %v584 = vadd.f32 %v323, %v583
      %v585 = vpop.f32.mrb[0].mxu0
      %586 = vmatprep.mubr.f32.mxu0 0.0
      %587 = vmatmul.mubr.f32.gmra.mrb[0].mxu0 %v387
      %v588 = vpop.f32.mrb[0].mxu0
      %v589 = vadd.f32 %v323, %v588
      %v590 = vpop.f32.mrb[0].mxu0
      %591 = vmatprep.mubr.f32.mxu0 0.0
      %592 = vmatmul.mubr.f32.gmra.mrb[0].mxu0 %v390
      %v593 = vpop.f32.mrb[0].mxu0
      %v594 = vadd.f32 %v323, %v593
      %v595 = vpop.f32.mrb[0].mxu0
      %596 = vmatprep.mubr.f32.mxu0 0.0
      %597 = vmatmul.mubr.f32.gmra.mrb[0].mxu0 %v393
      %v598 = vpop.f32.mrb[0].mxu0
      %v599 = vadd.f32 %v323, %v598
      %v600 = vpop.f32.mrb[0].mxu0
      %601 = vmatprep.mubr.f32.mxu0 0.0
      %602 = vmatmul.mubr.f32.gmra.mrb[0].mxu0 %v396
      %v603 = vpop.f32.mrb[0].mxu0
      %v604 = vadd.f32 %v323, %v603
      %v605 = vpop.f32.mrb[0].mxu0
      %606 = vmatprep.mubr.f32.mxu0 0.0
      %607 = vmatmul.mubr.f32.gmra.mrb[0].mxu0 %v399
      %v608 = vpop.f32.mrb[0].mxu0
      %v609 = vadd.f32 %v323, %v608
      %v610 = vpop.f32.mrb[0].mxu0
      %611 = vmatprep.mubr.f32.mxu0 0.0
      %612 = vmatmul.mubr.f32.gmra.mrb[0].mxu0 %v402
      %v613 = vpop.f32.mrb[0].mxu0
      %v614 = vadd.f32 %v323, %v613
      %v615 = vpop.f32.mrb[0].mxu0
      %616 = vmatprep.mubr.f32.mxu0 0.0
      %617 = vmatmul.mubr.f32.gmra.mrb[0].mxu0 %v405
      %v618 = vpop.f32.mrb[0].mxu0
      %v619 = vadd.f32 %v323, %v618
      %v620 = vpop.f32.mrb[0].mxu0
      %621 = vmatprep.mubr.f32.mxu0 0.0
      %622 = vmatmul.mubr.f32.gmra.mrb[0].mxu0 %v408
      %v623 = vpop.f32.mrb[0].mxu0
      %v624 = vadd.f32 %v323, %v623
      %v625 = vpop.f32.mrb[0].mxu0
      %626 = vmatprep.mubr.f32.mxu0 0.0
      %627 = vmatmul.mubr.f32.gmra.mrb[0].mxu0 %v411
      %v628 = vpop.f32.mrb[0].mxu0
      %v629 = vadd.f32 %v323, %v628
      %v630 = vpop.f32.mrb[0].mxu0
      %631 = vmatprep.mubr.f32.mxu0 0.0
      %632 = vmatmul.mubr.f32.gmra.mrb[0].mxu0 %v414
      %v633 = vpop.f32.mrb[0].mxu0
      %v634 = vadd.f32 %v323, %v633
      %v635 = vpop.f32.mrb[0].mxu0
      %636 = vmatprep.mubr.f32.mxu0 0.0
      %637 = vmatmul.mubr.f32.gmra.mrb[0].mxu0 %v417
      %v638 = vpop.f32.mrb[0].mxu0
      %v639 = vadd.f32 %v323, %v638
      %v640 = vpop.f32.mrb[0].mxu0
      %641 = vmatprep.mubr.f32.mxu0 0.0
      %642 = vmatmul.mubr.f32.gmra.mrb[0].mxu0 %v420
      %v643 = vpop.f32.mrb[0].mxu0
      %v644 = vadd.f32 %v323, %v643
      %v645 = vpop.f32.mrb[0].mxu0
      %646 = vdwg.mxu0
      %v647 = vmax.f32 %v489, 0.0
      %v648 = vmax.f32 %v494, 0.0
      %v649 = vmax.f32 %v499, 0.0
      %v650 = vmax.f32 %v504, 0.0
      %v651 = vmax.f32 %v509, 0.0
      %v652 = vmax.f32 %v514, 0.0
      %v653 = vmax.f32 %v519, 0.0
      %v654 = vmax.f32 %v524, 0.0
      %v655 = vmax.f32 %v529, 0.0
      %v656 = vmax.f32 %v534, 0.0
      %v657 = vmax.f32 %v539, 0.0
      %v658 = vmax.f32 %v544, 0.0
      %v659 = vmax.f32 %v549, 0.0
      %v660 = vmax.f32 %v554, 0.0
      %v661 = vmax.f32 %v559, 0.0
      %v662 = vmax.f32 %v564, 0.0
      %v663 = vmax.f32 %v569, 0.0
      %v664 = vmax.f32 %v574, 0.0
      %v665 = vmax.f32 %v579, 0.0
      %v666 = vmax.f32 %v584, 0.0
      %v667 = vmax.f32 %v589, 0.0
      %v668 = vmax.f32 %v594, 0.0
      %v669 = vmax.f32 %v599, 0.0
      %v670 = vmax.f32 %v604, 0.0
      %v671 = vmax.f32 %v609, 0.0
      %v672 = vmax.f32 %v614, 0.0
      %v673 = vmax.f32 %v619, 0.0
      %v674 = vmax.f32 %v624, 0.0
      %v675 = vmax.f32 %v629, 0.0
      %v676 = vmax.f32 %v634, 0.0
      %v677 = vmax.f32 %v639, 0.0
      %v678 = vmax.f32 %v644, 0.0
      %v679 = vld [vmem:[%s3] sm:$0xff]
      %v680 = vld [vmem:[%s3 + $0x8] sm:$0xff]
      %v681 = vld [vmem:[%s3 + $0x10] sm:$0xff]
      %v682 = vld [vmem:[%s3 + $0x18] sm:$0xff]
      %v683 = vld [vmem:[%s3 + $0x20] sm:$0xff]
      %v684 = vld [vmem:[%s3 + $0x28] sm:$0xff]
      %v685 = vld [vmem:[%s3 + $0x30] sm:$0xff]
      %v686 = vld [vmem:[%s3 + $0x38] sm:$0xff]
      %v687 = vld [vmem:[%s3 + $0x40] sm:$0xff]
      %v688 = vld [vmem:[%s3 + $0x48] sm:$0xff]
      %v689 = vld [vmem:[%s3 + $0x50] sm:$0xff]
      %v690 = vld [vmem:[%s3 + $0x58] sm:$0xff]
      %v691 = vld [vmem:[%s3 + $0x60] sm:$0xff]
      %v692 = vld [vmem:[%s3 + $0x68] sm:$0xff]
      %v693 = vld [vmem:[%s3 + $0x70] sm:$0xff]
      %v694 = vld [vmem:[%s3 + $0x78] sm:$0xff]
      %v695 = vld [vmem:[%s4] sm:$0x1]
      %v697 = vlaneseq
      %v698 = vshrl.u32 %v697, 7
      %v699 = vsub.s32 0, %v698
      %v700 = vrot.slane %v695, %v699
      %702 = vmatprep.subr.mxu0 0.0
      %703 = vmatpush1.msra.mxu0 %v679
      %704 = vmatprep.subr.mxu0 0.0
      %705 = vmatpush1.msra.mxu0 %v680
      %706 = vmatprep.subr.mxu0 0.0
      %707 = vmatpush1.msra.mxu0 %v681
      %708 = vmatprep.subr.mxu0 0.0
      %709 = vmatpush1.msra.mxu0 %v682
      %710 = vmatprep.subr.mxu0 0.0
      %711 = vmatpush1.msra.mxu0 %v683
      %712 = vmatprep.subr.mxu0 0.0
      %713 = vmatpush1.msra.mxu0 %v684
      %714 = vmatprep.subr.mxu0 0.0
      %715 = vmatpush1.msra.mxu0 %v685
      %716 = vmatprep.subr.mxu0 0.0
      %717 = vmatpush1.msra.mxu0 %v686
      %718 = vmatprep.subr.mxu0 0.0
      %719 = vmatpush1.msra.mxu0 %v687
      %720 = vmatprep.subr.mxu0 0.0
      %721 = vmatpush1.msra.mxu0 %v688
      %722 = vmatprep.subr.mxu0 0.0
      %723 = vmatpush1.msra.mxu0 %v689
      %724 = vmatprep.subr.mxu0 0.0
      %725 = vmatpush1.msra.mxu0 %v690
      %726 = vmatprep.subr.mxu0 0.0
      %727 = vmatpush1.msra.mxu0 %v691
      %728 = vmatprep.subr.mxu0 0.0
      %729 = vmatpush1.msra.mxu0 %v692
      %730 = vmatprep.subr.mxu0 0.0
      %731 = vmatpush1.msra.mxu0 %v693
      %732 = vmatprep.subr.mxu0 0.0
      %733 = vmatpush1.msra.mxu0 %v694
      %734 = vmatprep.subr.mxu0 0.0
      %735 = vmatpush1.msra.mxu0 0.0
      %736 = vmatprep.subr.mxu0 0.0
      %737 = vmatpush1.msra.mxu0 0.0
      %738 = vmatprep.subr.mxu0 0.0
      %739 = vmatpush1.msra.mxu0 0.0
      %740 = vmatprep.subr.mxu0 0.0
      %741 = vmatpush1.msra.mxu0 0.0
      %742 = vmatprep.subr.mxu0 0.0
      %743 = vmatpush1.msra.mxu0 0.0
      %744 = vmatprep.subr.mxu0 0.0
      %745 = vmatpush1.msra.mxu0 0.0
      %746 = vmatprep.subr.mxu0 0.0
      %747 = vmatpush1.msra.mxu0 0.0
      %748 = vmatprep.subr.mxu0 0.0
      %749 = vmatpush1.msra.mxu0 0.0
      %750 = vmatprep.subr.mxu0 0.0
      %751 = vmatpush1.msra.mxu0 0.0
      %752 = vmatprep.subr.mxu0 0.0
      %753 = vmatpush1.msra.mxu0 0.0
      %754 = vmatprep.subr.mxu0 0.0
      %755 = vmatpush1.msra.mxu0 0.0
      %756 = vmatprep.subr.mxu0 0.0
      %757 = vmatpush1.msra.mxu0 0.0
      %758 = vmatprep.subr.mxu0 0.0
      %759 = vmatpush1.msra.mxu0 0.0
      %760 = vmatprep.subr.mxu0 0.0
      %761 = vmatpush1.msra.mxu0 0.0
      %762 = vmatprep.subr.mxu0 0.0
      %763 = vmatpush1.msra.mxu0 0.0
      %764 = vmatprep.subr.mxu0 0.0
      %765 = vmatpush1.msra.mxu0 0.0
      %766 = vmatprep.mubr.f32.mxu0 0.0
      %767 = vmatmul.mubr.f32.gmra.mrb[0].mxu0 %v647
      %v768 = vpop.f32.mrb[0].mxu0
      %v769 = vadd.f32 %v700, %v768
      %v770 = vpop.f32.mrb[0].mxu0
      %771 = vmatprep.mubr.f32.mxu0 0.0
      %772 = vmatmul.mubr.f32.gmra.mrb[0].mxu0 %v648
      %v773 = vpop.f32.mrb[0].mxu0
      %v774 = vadd.f32 %v700, %v773
      %v775 = vpop.f32.mrb[0].mxu0
      %776 = vmatprep.mubr.f32.mxu0 0.0
      %777 = vmatmul.mubr.f32.gmra.mrb[0].mxu0 %v649
      %v778 = vpop.f32.mrb[0].mxu0
      %v779 = vadd.f32 %v700, %v778
      %v780 = vpop.f32.mrb[0].mxu0
      %781 = vmatprep.mubr.f32.mxu0 0.0
      %782 = vmatmul.mubr.f32.gmra.mrb[0].mxu0 %v650
      %v783 = vpop.f32.mrb[0].mxu0
      %v784 = vadd.f32 %v700, %v783
      %v785 = vpop.f32.mrb[0].mxu0
      %786 = vmatprep.mubr.f32.mxu0 0.0
      %787 = vmatmul.mubr.f32.gmra.mrb[0].mxu0 %v651
      %v788 = vpop.f32.mrb[0].mxu0
      %v789 = vadd.f32 %v700, %v788
      %v790 = vpop.f32.mrb[0].mxu0
      %791 = vmatprep.mubr.f32.mxu0 0.0
      %792 = vmatmul.mubr.f32.gmra.mrb[0].mxu0 %v652
      %v793 = vpop.f32.mrb[0].mxu0
      %v794 = vadd.f32 %v700, %v793
      %v795 = vpop.f32.mrb[0].mxu0
      %796 = vmatprep.mubr.f32.mxu0 0.0
      %797 = vmatmul.mubr.f32.gmra.mrb[0].mxu0 %v653
      %v798 = vpop.f32.mrb[0].mxu0
      %v799 = vadd.f32 %v700, %v798
      %v800 = vpop.f32.mrb[0].mxu0
      %801 = vmatprep.mubr.f32.mxu0 0.0
      %802 = vmatmul.mubr.f32.gmra.mrb[0].mxu0 %v654
      %v803 = vpop.f32.mrb[0].mxu0
      %v804 = vadd.f32 %v700, %v803
      %v805 = vpop.f32.mrb[0].mxu0
      %806 = vmatprep.mubr.f32.mxu0 0.0
      %807 = vmatmul.mubr.f32.gmra.mrb[0].mxu0 %v655
      %v808 = vpop.f32.mrb[0].mxu0
      %v809 = vadd.f32 %v700, %v808
      %v810 = vpop.f32.mrb[0].mxu0
      %811 = vmatprep.mubr.f32.mxu0 0.0
      %812 = vmatmul.mubr.f32.gmra.mrb[0].mxu0 %v656
      %v813 = vpop.f32.mrb[0].mxu0
      %v814 = vadd.f32 %v700, %v813
      %v815 = vpop.f32.mrb[0].mxu0
      %816 = vmatprep.mubr.f32.mxu0 0.0
      %817 = vmatmul.mubr.f32.gmra.mrb[0].mxu0 %v657
      %v818 = vpop.f32.mrb[0].mxu0
      %v819 = vadd.f32 %v700, %v818
      %v820 = vpop.f32.mrb[0].mxu0
      %821 = vmatprep.mubr.f32.mxu0 0.0
      %822 = vmatmul.mubr.f32.gmra.mrb[0].mxu0 %v658
      %v823 = vpop.f32.mrb[0].mxu0
      %v824 = vadd.f32 %v700, %v823
      %v825 = vpop.f32.mrb[0].mxu0
      %826 = vmatprep.mubr.f32.mxu0 0.0
      %827 = vmatmul.mubr.f32.gmra.mrb[0].mxu0 %v659
      %v828 = vpop.f32.mrb[0].mxu0
      %v829 = vadd.f32 %v700, %v828
      %v830 = vpop.f32.mrb[0].mxu0
      %831 = vmatprep.mubr.f32.mxu0 0.0
      %832 = vmatmul.mubr.f32.gmra.mrb[0].mxu0 %v660
      %v833 = vpop.f32.mrb[0].mxu0
      %v834 = vadd.f32 %v700, %v833
      %v835 = vpop.f32.mrb[0].mxu0
      %836 = vmatprep.mubr.f32.mxu0 0.0
      %837 = vmatmul.mubr.f32.gmra.mrb[0].mxu0 %v661
      %v838 = vpop.f32.mrb[0].mxu0
      %v839 = vadd.f32 %v700, %v838
      %v840 = vpop.f32.mrb[0].mxu0
      %841 = vmatprep.mubr.f32.mxu0 0.0
      %842 = vmatmul.mubr.f32.gmra.mrb[0].mxu0 %v662
      %v843 = vpop.f32.mrb[0].mxu0
      %v844 = vadd.f32 %v700, %v843
      %v845 = vpop.f32.mrb[0].mxu0
      %846 = vmatprep.mubr.f32.mxu0 0.0
      %847 = vmatmul.mubr.f32.gmra.mrb[0].mxu0 %v663
      %v848 = vpop.f32.mrb[0].mxu0
      %v849 = vadd.f32 %v700, %v848
      %v850 = vpop.f32.mrb[0].mxu0
      %851 = vmatprep.mubr.f32.mxu0 0.0
      %852 = vmatmul.mubr.f32.gmra.mrb[0].mxu0 %v664
      %v853 = vpop.f32.mrb[0].mxu0
      %v854 = vadd.f32 %v700, %v853
      %v855 = vpop.f32.mrb[0].mxu0
      %856 = vmatprep.mubr.f32.mxu0 0.0
      %857 = vmatmul.mubr.f32.gmra.mrb[0].mxu0 %v665
      %v858 = vpop.f32.mrb[0].mxu0
      %v859 = vadd.f32 %v700, %v858
      %v860 = vpop.f32.mrb[0].mxu0
      %861 = vmatprep.mubr.f32.mxu0 0.0
      %862 = vmatmul.mubr.f32.gmra.mrb[0].mxu0 %v666
      %v863 = vpop.f32.mrb[0].mxu0
      %v864 = vadd.f32 %v700, %v863
      %v865 = vpop.f32.mrb[0].mxu0
      %866 = vmatprep.mubr.f32.mxu0 0.0
      %867 = vmatmul.mubr.f32.gmra.mrb[0].mxu0 %v667
      %v868 = vpop.f32.mrb[0].mxu0
      %v869 = vadd.f32 %v700, %v868
      %v870 = vpop.f32.mrb[0].mxu0
      %871 = vmatprep.mubr.f32.mxu0 0.0
      %872 = vmatmul.mubr.f32.gmra.mrb[0].mxu0 %v668
      %v873 = vpop.f32.mrb[0].mxu0
      %v874 = vadd.f32 %v700, %v873
      %v875 = vpop.f32.mrb[0].mxu0
      %876 = vmatprep.mubr.f32.mxu0 0.0
      %877 = vmatmul.mubr.f32.gmra.mrb[0].mxu0 %v669
      %v878 = vpop.f32.mrb[0].mxu0
      %v879 = vadd.f32 %v700, %v878
      %v880 = vpop.f32.mrb[0].mxu0
      %881 = vmatprep.mubr.f32.mxu0 0.0
      %882 = vmatmul.mubr.f32.gmra.mrb[0].mxu0 %v670
      %v883 = vpop.f32.mrb[0].mxu0
      %v884 = vadd.f32 %v700, %v883
      %v885 = vpop.f32.mrb[0].mxu0
      %886 = vmatprep.mubr.f32.mxu0 0.0
      %887 = vmatmul.mubr.f32.gmra.mrb[0].mxu0 %v671
      %v888 = vpop.f32.mrb[0].mxu0
      %v889 = vadd.f32 %v700, %v888
      %v890 = vpop.f32.mrb[0].mxu0
      %891 = vmatprep.mubr.f32.mxu0 0.0
      %892 = vmatmul.mubr.f32.gmra.mrb[0].mxu0 %v672
      %v893 = vpop.f32.mrb[0].mxu0
      %v894 = vadd.f32 %v700, %v893
      %v895 = vpop.f32.mrb[0].mxu0
      %896 = vmatprep.mubr.f32.mxu0 0.0
      %897 = vmatmul.mubr.f32.gmra.mrb[0].mxu0 %v673
      %v898 = vpop.f32.mrb[0].mxu0
      %v899 = vadd.f32 %v700, %v898
      %v900 = vpop.f32.mrb[0].mxu0
      %901 = vmatprep.mubr.f32.mxu0 0.0
      %902 = vmatmul.mubr.f32.gmra.mrb[0].mxu0 %v674
      %v903 = vpop.f32.mrb[0].mxu0
      %v904 = vadd.f32 %v700, %v903
      %v905 = vpop.f32.mrb[0].mxu0
      %906 = vmatprep.mubr.f32.mxu0 0.0
      %907 = vmatmul.mubr.f32.gmra.mrb[0].mxu0 %v675
      %v908 = vpop.f32.mrb[0].mxu0
      %v909 = vadd.f32 %v700, %v908
      %v910 = vpop.f32.mrb[0].mxu0
      %911 = vmatprep.mubr.f32.mxu0 0.0
      %912 = vmatmul.mubr.f32.gmra.mrb[0].mxu0 %v676
      %v913 = vpop.f32.mrb[0].mxu0
      %v914 = vadd.f32 %v700, %v913
      %v915 = vpop.f32.mrb[0].mxu0
      %916 = vmatprep.mubr.f32.mxu0 0.0
      %917 = vmatmul.mubr.f32.gmra.mrb[0].mxu0 %v677
      %v918 = vpop.f32.mrb[0].mxu0
      %v919 = vadd.f32 %v700, %v918
      %v920 = vpop.f32.mrb[0].mxu0
      %921 = vmatprep.mubr.f32.mxu0 0.0
      %922 = vmatmul.mubr.f32.gmra.mrb[0].mxu0 %v678
      %v923 = vpop.f32.mrb[0].mxu0
      %v924 = vadd.f32 %v700, %v923
      %v925 = vpop.f32.mrb[0].mxu0
      %926 = vdwg.mxu0
      %v927 = vmax.f32 %v769, 0.0
      %v928 = vmax.f32 %v774, 0.0
      %v929 = vmax.f32 %v779, 0.0
      %v930 = vmax.f32 %v784, 0.0
      %v931 = vmax.f32 %v789, 0.0
      %v932 = vmax.f32 %v794, 0.0
      %v933 = vmax.f32 %v799, 0.0
      %v934 = vmax.f32 %v804, 0.0
      %v935 = vmax.f32 %v809, 0.0
      %v936 = vmax.f32 %v814, 0.0
      %v937 = vmax.f32 %v819, 0.0
      %v938 = vmax.f32 %v824, 0.0
      %v939 = vmax.f32 %v829, 0.0
      %v940 = vmax.f32 %v834, 0.0
      %v941 = vmax.f32 %v839, 0.0
      %v942 = vmax.f32 %v844, 0.0
      %v943 = vmax.f32 %v849, 0.0
      %v944 = vmax.f32 %v854, 0.0
      %v945 = vmax.f32 %v859, 0.0
      %v946 = vmax.f32 %v864, 0.0
      %v947 = vmax.f32 %v869, 0.0
      %v948 = vmax.f32 %v874, 0.0
      %v949 = vmax.f32 %v879, 0.0
      %v950 = vmax.f32 %v884, 0.0
      %v951 = vmax.f32 %v889, 0.0
      %v952 = vmax.f32 %v894, 0.0
      %v953 = vmax.f32 %v899, 0.0
      %v954 = vmax.f32 %v904, 0.0
      %v955 = vmax.f32 %v909, 0.0
      %v956 = vmax.f32 %v914, 0.0
      %v957 = vmax.f32 %v919, 0.0
      %v958 = vmax.f32 %v924, 0.0
      %v959 = vld [vmem:[%s5] sm:$0xff]
      %v960 = vld [vmem:[%s5 + $0x8] sm:$0xff]
      %v961 = vld [vmem:[%s5 + $0x10] sm:$0xff]
      %v962 = vld [vmem:[%s5 + $0x18] sm:$0xff]
      %v963 = vld [vmem:[%s5 + $0x20] sm:$0xff]
      %v964 = vld [vmem:[%s5 + $0x28] sm:$0xff]
      %v965 = vld [vmem:[%s5 + $0x30] sm:$0xff]
      %v966 = vld [vmem:[%s5 + $0x38] sm:$0xff]
      %v967 = vld [vmem:[%s5 + $0x40] sm:$0xff]
      %v968 = vld [vmem:[%s5 + $0x48] sm:$0xff]
      %v969 = vld [vmem:[%s5 + $0x50] sm:$0xff]
      %v970 = vld [vmem:[%s5 + $0x58] sm:$0xff]
      %v971 = vld [vmem:[%s5 + $0x60] sm:$0xff]
      %v972 = vld [vmem:[%s5 + $0x68] sm:$0xff]
      %v973 = vld [vmem:[%s5 + $0x70] sm:$0xff]
      %v974 = vld [vmem:[%s5 + $0x78] sm:$0xff]
      %v975 = vld [vmem:[%s6] sm:$0x1]
      %v977 = vlaneseq
      %v978 = vshrl.u32 %v977, 7
      %v979 = vsub.s32 0, %v978
      %v980 = vrot.slane %v975, %v979
      %982 = vmatprep.subr.mxu0 0.0
      %983 = vmatpush1.msra.mxu0 %v959
      %984 = vmatprep.subr.mxu0 0.0
      %985 = vmatpush1.msra.mxu0 %v960
      %986 = vmatprep.subr.mxu0 0.0
      %987 = vmatpush1.msra.mxu0 %v961
      %988 = vmatprep.subr.mxu0 0.0
      %989 = vmatpush1.msra.mxu0 %v962
      %990 = vmatprep.subr.mxu0 0.0
      %991 = vmatpush1.msra.mxu0 %v963
      %992 = vmatprep.subr.mxu0 0.0
      %993 = vmatpush1.msra.mxu0 %v964
      %994 = vmatprep.subr.mxu0 0.0
      %995 = vmatpush1.msra.mxu0 %v965
      %996 = vmatprep.subr.mxu0 0.0
      %997 = vmatpush1.msra.mxu0 %v966
      %998 = vmatprep.subr.mxu0 0.0
      %999 = vmatpush1.msra.mxu0 %v967
      %1000 = vmatprep.subr.mxu0 0.0
      %1001 = vmatpush1.msra.mxu0 %v968
      %1002 = vmatprep.subr.mxu0 0.0
      %1003 = vmatpush1.msra.mxu0 %v969
      %1004 = vmatprep.subr.mxu0 0.0
      %1005 = vmatpush1.msra.mxu0 %v970
      %1006 = vmatprep.subr.mxu0 0.0
      %1007 = vmatpush1.msra.mxu0 %v971
      %1008 = vmatprep.subr.mxu0 0.0
      %1009 = vmatpush1.msra.mxu0 %v972
      %1010 = vmatprep.subr.mxu0 0.0
      %1011 = vmatpush1.msra.mxu0 %v973
      %1012 = vmatprep.subr.mxu0 0.0
      %1013 = vmatpush1.msra.mxu0 %v974
      %1014 = vmatprep.subr.mxu0 0.0
      %1015 = vmatpush1.msra.mxu0 0.0
      %1016 = vmatprep.subr.mxu0 0.0
      %1017 = vmatpush1.msra.mxu0 0.0
      %1018 = vmatprep.subr.mxu0 0.0
      %1019 = vmatpush1.msra.mxu0 0.0
      %1020 = vmatprep.subr.mxu0 0.0
      %1021 = vmatpush1.msra.mxu0 0.0
      %1022 = vmatprep.subr.mxu0 0.0
      %1023 = vmatpush1.msra.mxu0 0.0
      %1024 = vmatprep.subr.mxu0 0.0
      %1025 = vmatpush1.msra.mxu0 0.0
      %1026 = vmatprep.subr.mxu0 0.0
      %1027 = vmatpush1.msra.mxu0 0.0
      %1028 = vmatprep.subr.mxu0 0.0
      %1029 = vmatpush1.msra.mxu0 0.0
      %1030 = vmatprep.subr.mxu0 0.0
      %1031 = vmatpush1.msra.mxu0 0.0
      %1032 = vmatprep.subr.mxu0 0.0
      %1033 = vmatpush1.msra.mxu0 0.0
      %1034 = vmatprep.subr.mxu0 0.0
      %1035 = vmatpush1.msra.mxu0 0.0
      %1036 = vmatprep.subr.mxu0 0.0
      %1037 = vmatpush1.msra.mxu0 0.0
      %1038 = vmatprep.subr.mxu0 0.0
      %1039 = vmatpush1.msra.mxu0 0.0
      %1040 = vmatprep.subr.mxu0 0.0
      %1041 = vmatpush1.msra.mxu0 0.0
      %1042 = vmatprep.subr.mxu0 0.0
      %1043 = vmatpush1.msra.mxu0 0.0
      %1044 = vmatprep.subr.mxu0 0.0
      %1045 = vmatpush1.msra.mxu0 0.0
      %1046 = vmatprep.mubr.f32.mxu0 0.0
      %1047 = vmatmul.mubr.f32.gmra.mrb[0].mxu0 %v927
      %v1048 = vpop.f32.mrb[0].mxu0
      %v1049 = vadd.f32 %v980, %v1048
      %v1050 = vpop.f32.mrb[0].mxu0
      %1051 = vmatprep.mubr.f32.mxu0 0.0
      %1052 = vmatmul.mubr.f32.gmra.mrb[0].mxu0 %v928
      %v1053 = vpop.f32.mrb[0].mxu0
      %v1054 = vadd.f32 %v980, %v1053
      %v1055 = vpop.f32.mrb[0].mxu0
      %1056 = vmatprep.mubr.f32.mxu0 0.0
      %1057 = vmatmul.mubr.f32.gmra.mrb[0].mxu0 %v929
      %v1058 = vpop.f32.mrb[0].mxu0
      %v1059 = vadd.f32 %v980, %v1058
      %v1060 = vpop.f32.mrb[0].mxu0
      %1061 = vmatprep.mubr.f32.mxu0 0.0
      %1062 = vmatmul.mubr.f32.gmra.mrb[0].mxu0 %v930
      %v1063 = vpop.f32.mrb[0].mxu0
      %v1064 = vadd.f32 %v980, %v1063
      %v1065 = vpop.f32.mrb[0].mxu0
      %1066 = vmatprep.mubr.f32.mxu0 0.0
      %1067 = vmatmul.mubr.f32.gmra.mrb[0].mxu0 %v931
      %v1068 = vpop.f32.mrb[0].mxu0
      %v1069 = vadd.f32 %v980, %v1068
      %v1070 = vpop.f32.mrb[0].mxu0
      %1071 = vmatprep.mubr.f32.mxu0 0.0
      %1072 = vmatmul.mubr.f32.gmra.mrb[0].mxu0 %v932
      %v1073 = vpop.f32.mrb[0].mxu0
      %v1074 = vadd.f32 %v980, %v1073
      %v1075 = vpop.f32.mrb[0].mxu0
      %1076 = vmatprep.mubr.f32.mxu0 0.0
      %1077 = vmatmul.mubr.f32.gmra.mrb[0].mxu0 %v933
      %v1078 = vpop.f32.mrb[0].mxu0
      %v1079 = vadd.f32 %v980, %v1078
      %v1080 = vpop.f32.mrb[0].mxu0
      %1081 = vmatprep.mubr.f32.mxu0 0.0
      %1082 = vmatmul.mubr.f32.gmra.mrb[0].mxu0 %v934
      %v1083 = vpop.f32.mrb[0].mxu0
      %v1084 = vadd.f32 %v980, %v1083
      %v1085 = vpop.f32.mrb[0].mxu0
      %1086 = vmatprep.mubr.f32.mxu0 0.0
      %1087 = vmatmul.mubr.f32.gmra.mrb[0].mxu0 %v935
      %v1088 = vpop.f32.mrb[0].mxu0
      %v1089 = vadd.f32 %v980, %v1088
      %v1090 = vpop.f32.mrb[0].mxu0
      %1091 = vmatprep.mubr.f32.mxu0 0.0
      %1092 = vmatmul.mubr.f32.gmra.mrb[0].mxu0 %v936
      %v1093 = vpop.f32.mrb[0].mxu0
      %v1094 = vadd.f32 %v980, %v1093
      %v1095 = vpop.f32.mrb[0].mxu0
      %1096 = vmatprep.mubr.f32.mxu0 0.0
      %1097 = vmatmul.mubr.f32.gmra.mrb[0].mxu0 %v937
      %v1098 = vpop.f32.mrb[0].mxu0
      %v1099 = vadd.f32 %v980, %v1098
      %v1100 = vpop.f32.mrb[0].mxu0
      %1101 = vmatprep.mubr.f32.mxu0 0.0
      %1102 = vmatmul.mubr.f32.gmra.mrb[0].mxu0 %v938
      %v1103 = vpop.f32.mrb[0].mxu0
      %v1104 = vadd.f32 %v980, %v1103
      %v1105 = vpop.f32.mrb[0].mxu0
      %1106 = vmatprep.mubr.f32.mxu0 0.0
      %1107 = vmatmul.mubr.f32.gmra.mrb[0].mxu0 %v939
      %v1108 = vpop.f32.mrb[0].mxu0
      %v1109 = vadd.f32 %v980, %v1108
      %v1110 = vpop.f32.mrb[0].mxu0
      %1111 = vmatprep.mubr.f32.mxu0 0.0
      %1112 = vmatmul.mubr.f32.gmra.mrb[0].mxu0 %v940
      %v1113 = vpop.f32.mrb[0].mxu0
      %v1114 = vadd.f32 %v980, %v1113
      %v1115 = vpop.f32.mrb[0].mxu0
      %1116 = vmatprep.mubr.f32.mxu0 0.0
      %1117 = vmatmul.mubr.f32.gmra.mrb[0].mxu0 %v941
      %v1118 = vpop.f32.mrb[0].mxu0
      %v1119 = vadd.f32 %v980, %v1118
      %v1120 = vpop.f32.mrb[0].mxu0
      %1121 = vmatprep.mubr.f32.mxu0 0.0
      %1122 = vmatmul.mubr.f32.gmra.mrb[0].mxu0 %v942
      %v1123 = vpop.f32.mrb[0].mxu0
      %v1124 = vadd.f32 %v980, %v1123
      %v1125 = vpop.f32.mrb[0].mxu0
      %1126 = vmatprep.mubr.f32.mxu0 0.0
      %1127 = vmatmul.mubr.f32.gmra.mrb[0].mxu0 %v943
      %v1128 = vpop.f32.mrb[0].mxu0
      %v1129 = vadd.f32 %v980, %v1128
      %v1130 = vpop.f32.mrb[0].mxu0
      %1131 = vmatprep.mubr.f32.mxu0 0.0
      %1132 = vmatmul.mubr.f32.gmra.mrb[0].mxu0 %v944
      %v1133 = vpop.f32.mrb[0].mxu0
      %v1134 = vadd.f32 %v980, %v1133
      %v1135 = vpop.f32.mrb[0].mxu0
      %1136 = vmatprep.mubr.f32.mxu0 0.0
      %1137 = vmatmul.mubr.f32.gmra.mrb[0].mxu0 %v945
      %v1138 = vpop.f32.mrb[0].mxu0
      %v1139 = vadd.f32 %v980, %v1138
      %v1140 = vpop.f32.mrb[0].mxu0
      %1141 = vmatprep.mubr.f32.mxu0 0.0
      %1142 = vmatmul.mubr.f32.gmra.mrb[0].mxu0 %v946
      %v1143 = vpop.f32.mrb[0].mxu0
      %v1144 = vadd.f32 %v980, %v1143
      %v1145 = vpop.f32.mrb[0].mxu0
      %1146 = vmatprep.mubr.f32.mxu0 0.0
      %1147 = vmatmul.mubr.f32.gmra.mrb[0].mxu0 %v947
      %v1148 = vpop.f32.mrb[0].mxu0
      %v1149 = vadd.f32 %v980, %v1148
      %v1150 = vpop.f32.mrb[0].mxu0
      %1151 = vmatprep.mubr.f32.mxu0 0.0
      %1152 = vmatmul.mubr.f32.gmra.mrb[0].mxu0 %v948
      %v1153 = vpop.f32.mrb[0].mxu0
      %v1154 = vadd.f32 %v980, %v1153
      %v1155 = vpop.f32.mrb[0].mxu0
      %1156 = vmatprep.mubr.f32.mxu0 0.0
      %1157 = vmatmul.mubr.f32.gmra.mrb[0].mxu0 %v949
      %v1158 = vpop.f32.mrb[0].mxu0
      %v1159 = vadd.f32 %v980, %v1158
      %v1160 = vpop.f32.mrb[0].mxu0
      %1161 = vmatprep.mubr.f32.mxu0 0.0
      %1162 = vmatmul.mubr.f32.gmra.mrb[0].mxu0 %v950
      %v1163 = vpop.f32.mrb[0].mxu0
      %v1164 = vadd.f32 %v980, %v1163
      %v1165 = vpop.f32.mrb[0].mxu0
      %1166 = vmatprep.mubr.f32.mxu0 0.0
      %1167 = vmatmul.mubr.f32.gmra.mrb[0].mxu0 %v951
      %v1168 = vpop.f32.mrb[0].mxu0
      %v1169 = vadd.f32 %v980, %v1168
      %v1170 = vpop.f32.mrb[0].mxu0
      %1171 = vmatprep.mubr.f32.mxu0 0.0
      %1172 = vmatmul.mubr.f32.gmra.mrb[0].mxu0 %v952
      %v1173 = vpop.f32.mrb[0].mxu0
      %v1174 = vadd.f32 %v980, %v1173
      %v1175 = vpop.f32.mrb[0].mxu0
      %1176 = vmatprep.mubr.f32.mxu0 0.0
      %1177 = vmatmul.mubr.f32.gmra.mrb[0].mxu0 %v953
      %v1178 = vpop.f32.mrb[0].mxu0
      %v1179 = vadd.f32 %v980, %v1178
      %v1180 = vpop.f32.mrb[0].mxu0
      %1181 = vmatprep.mubr.f32.mxu0 0.0
      %1182 = vmatmul.mubr.f32.gmra.mrb[0].mxu0 %v954
      %v1183 = vpop.f32.mrb[0].mxu0
      %v1184 = vadd.f32 %v980, %v1183
      %v1185 = vpop.f32.mrb[0].mxu0
      %1186 = vmatprep.mubr.f32.mxu0 0.0
      %1187 = vmatmul.mubr.f32.gmra.mrb[0].mxu0 %v955
      %v1188 = vpop.f32.mrb[0].mxu0
      %v1189 = vadd.f32 %v980, %v1188
      %v1190 = vpop.f32.mrb[0].mxu0
      %1191 = vmatprep.mubr.f32.mxu0 0.0
      %1192 = vmatmul.mubr.f32.gmra.mrb[0].mxu0 %v956
      %v1193 = vpop.f32.mrb[0].mxu0
      %v1194 = vadd.f32 %v980, %v1193
      %v1195 = vpop.f32.mrb[0].mxu0
      %1196 = vmatprep.mubr.f32.mxu0 0.0
      %1197 = vmatmul.mubr.f32.gmra.mrb[0].mxu0 %v957
      %v1198 = vpop.f32.mrb[0].mxu0
      %v1199 = vadd.f32 %v980, %v1198
      %v1200 = vpop.f32.mrb[0].mxu0
      %1201 = vmatprep.mubr.f32.mxu0 0.0
      %1202 = vmatmul.mubr.f32.gmra.mrb[0].mxu0 %v958
      %v1203 = vpop.f32.mrb[0].mxu0
      %v1204 = vadd.f32 %v980, %v1203
      %v1205 = vpop.f32.mrb[0].mxu0
      %1206 = vdwg.mxu0
      %v1207 = vmax.f32 %v1049, 0.0
      %v1208 = vmax.f32 %v1054, 0.0
      %v1209 = vmax.f32 %v1059, 0.0
      %v1210 = vmax.f32 %v1064, 0.0
      %v1211 = vmax.f32 %v1069, 0.0
      %v1212 = vmax.f32 %v1074, 0.0
      %v1213 = vmax.f32 %v1079, 0.0
      %v1214 = vmax.f32 %v1084, 0.0
      %v1215 = vmax.f32 %v1089, 0.0
      %v1216 = vmax.f32 %v1094, 0.0
      %v1217 = vmax.f32 %v1099, 0.0
      %v1218 = vmax.f32 %v1104, 0.0
      %v1219 = vmax.f32 %v1109, 0.0
      %v1220 = vmax.f32 %v1114, 0.0
      %v1221 = vmax.f32 %v1119, 0.0
      %v1222 = vmax.f32 %v1124, 0.0
      %v1223 = vmax.f32 %v1129, 0.0
      %v1224 = vmax.f32 %v1134, 0.0
      %v1225 = vmax.f32 %v1139, 0.0
      %v1226 = vmax.f32 %v1144, 0.0
      %v1227 = vmax.f32 %v1149, 0.0
      %v1228 = vmax.f32 %v1154, 0.0
      %v1229 = vmax.f32 %v1159, 0.0
      %v1230 = vmax.f32 %v1164, 0.0
      %v1231 = vmax.f32 %v1169, 0.0
      %v1232 = vmax.f32 %v1174, 0.0
      %v1233 = vmax.f32 %v1179, 0.0
      %v1234 = vmax.f32 %v1184, 0.0
      %v1235 = vmax.f32 %v1189, 0.0
      %v1236 = vmax.f32 %v1194, 0.0
      %v1237 = vmax.f32 %v1199, 0.0
      %v1238 = vmax.f32 %v1204, 0.0
      %v1239 = vadd.f32 %v1207, %v489
      %v1240 = vadd.f32 %v1208, %v494
      %v1241 = vadd.f32 %v1209, %v499
      %v1242 = vadd.f32 %v1210, %v504
      %v1243 = vadd.f32 %v1211, %v509
      %v1244 = vadd.f32 %v1212, %v514
      %v1245 = vadd.f32 %v1213, %v519
      %v1246 = vadd.f32 %v1214, %v524
      %v1247 = vadd.f32 %v1215, %v529
      %v1248 = vadd.f32 %v1216, %v534
      %v1249 = vadd.f32 %v1217, %v539
      %v1250 = vadd.f32 %v1218, %v544
      %v1251 = vadd.f32 %v1219, %v549
      %v1252 = vadd.f32 %v1220, %v554
      %v1253 = vadd.f32 %v1221, %v559
      %v1254 = vadd.f32 %v1222, %v564
      %v1255 = vadd.f32 %v1223, %v569
      %v1256 = vadd.f32 %v1224, %v574
      %v1257 = vadd.f32 %v1225, %v579
      %v1258 = vadd.f32 %v1226, %v584
      %v1259 = vadd.f32 %v1227, %v589
      %v1260 = vadd.f32 %v1228, %v594
      %v1261 = vadd.f32 %v1229, %v599
      %v1262 = vadd.f32 %v1230, %v604
      %v1263 = vadd.f32 %v1231, %v609
      %v1264 = vadd.f32 %v1232, %v614
      %v1265 = vadd.f32 %v1233, %v619
      %v1266 = vadd.f32 %v1234, %v624
      %v1267 = vadd.f32 %v1235, %v629
      %v1268 = vadd.f32 %v1236, %v634
      %v1269 = vadd.f32 %v1237, %v639
      %v1270 = vadd.f32 %v1238, %v644
      %vm1271 = vcmask 523264
      %1272 = vst.msk [vmem:[%s280] sm:$0xff] %vm1271, %v1239
      %1273 = vst.msk [vmem:[%s280 + $0x8] sm:$0xff] %vm1271, %v1240
      %1274 = vst.msk [vmem:[%s280 + $0x10] sm:$0xff] %vm1271, %v1241
      %1275 = vst.msk [vmem:[%s280 + $0x18] sm:$0xff] %vm1271, %v1242
      %1276 = vst.msk [vmem:[%s280 + $0x20] sm:$0xff] %vm1271, %v1243
      %1277 = vst.msk [vmem:[%s280 + $0x28] sm:$0xff] %vm1271, %v1244
      %1278 = vst.msk [vmem:[%s280 + $0x30] sm:$0xff] %vm1271, %v1245
      %1279 = vst.msk [vmem:[%s280 + $0x38] sm:$0xff] %vm1271, %v1246
      %1280 = vst.msk [vmem:[%s280 + $0x40] sm:$0xff] %vm1271, %v1247
      %1281 = vst.msk [vmem:[%s280 + $0x48] sm:$0xff] %vm1271, %v1248
      %1282 = vst.msk [vmem:[%s280 + $0x50] sm:$0xff] %vm1271, %v1249
      %1283 = vst.msk [vmem:[%s280 + $0x58] sm:$0xff] %vm1271, %v1250
      %1284 = vst.msk [vmem:[%s280 + $0x60] sm:$0xff] %vm1271, %v1251
      %1285 = vst.msk [vmem:[%s280 + $0x68] sm:$0xff] %vm1271, %v1252
      %1286 = vst.msk [vmem:[%s280 + $0x70] sm:$0xff] %vm1271, %v1253
      %1287 = vst.msk [vmem:[%s280 + $0x78] sm:$0xff] %vm1271, %v1254
      %1288 = vst.msk [vmem:[%s280 + $0x80] sm:$0xff] %vm1271, %v1255
      %1289 = vst.msk [vmem:[%s280 + $0x88] sm:$0xff] %vm1271, %v1256
      %1290 = vst.msk [vmem:[%s280 + $0x90] sm:$0xff] %vm1271, %v1257
      %1291 = vst.msk [vmem:[%s280 + $0x98] sm:$0xff] %vm1271, %v1258
      %1292 = vst.msk [vmem:[%s280 + $0xa0] sm:$0xff] %vm1271, %v1259
      %1293 = vst.msk [vmem:[%s280 + $0xa8] sm:$0xff] %vm1271, %v1260
      %1294 = vst.msk [vmem:[%s280 + $0xb0] sm:$0xff] %vm1271, %v1261
      %1295 = vst.msk [vmem:[%s280 + $0xb8] sm:$0xff] %vm1271, %v1262
      %1296 = vst.msk [vmem:[%s280 + $0xc0] sm:$0xff] %vm1271, %v1263
      %1297 = vst.msk [vmem:[%s280 + $0xc8] sm:$0xff] %vm1271, %v1264
      %1298 = vst.msk [vmem:[%s280 + $0xd0] sm:$0xff] %vm1271, %v1265
      %1299 = vst.msk [vmem:[%s280 + $0xd8] sm:$0xff] %vm1271, %v1266
      %1300 = vst.msk [vmem:[%s280 + $0xe0] sm:$0xff] %vm1271, %v1267
      %1301 = vst.msk [vmem:[%s280 + $0xe8] sm:$0xff] %vm1271, %v1268
      %1302 = vst.msk [vmem:[%s280 + $0xf0] sm:$0xff] %vm1271, %v1269
      %1303 = vst.msk [vmem:[%s280 + $0xf8] sm:$0xff] %vm1271, %v1270
      %s1304 = smul.u32 32, %s18
      %p1305 = scmp.lt.s32.totalorder %s1304, 63
      %s1306 = scalar_select %p1305, %s1304, 63
      %s1307 = smul.addr %s1306, 8
      %s1308 = scalar_lea.vmem %s7, %s1307
      // Predicated region
      $region49: #{tpu_custom_call.1} parent=47 // pred_check
        %p1309 = pneg %p188
      $region50: #{tpu_custom_call.1} parent=47 // pred_check_branch
        %1311 = sbr.rel (%p1309) target = $region52
      $region51: #{tpu_custom_call.1} parent=47 // pred_region
        %s1312 = smul.u32 32, %s18
      $region52: #{tpu_custom_call.1} parent=47 // pred_fallthru
        _
    $region48: #{tpu_custom_call.1} parent=5 // pred_fallthru
      _
    %p1313 = scmp.le.s32.totalorder 2, %s13
    // Predicated region
    $region53: #{tpu_custom_call.1} parent=5 // pred_check
      %p1314 = pneg %p1313
    $region54: #{tpu_custom_call.1} parent=5 // pred_check_branch
      %1316 = sbr.rel (%p1314) target = $region56
    $region55: #{tpu_custom_call.1} parent=5 // pred_region
      %s1317 = ssub.s32 %s13, 2
      // Predicated region
      $region57: #{tpu_custom_call.1} parent=55 // pred_check
        %p1318 = pneg %p194
      $region58: #{tpu_custom_call.1} parent=55 // pred_check_branch
        %1320 = sbr.rel (%p1318) target = $region60
      $region59: #{tpu_custom_call.1} parent=55 // pred_region
        %s1321 = smul.u32 32, %s19
        %p1322 = scmp.lt.s32.totalorder %s1321, 63
        %s1323 = scalar_select %p1322, %s1321, 63
        %s1324 = smul.addr %s1323, 8
        %s1325 = scalar_lea.vmem %s7, %s1324
      $region60: #{tpu_custom_call.1} parent=55 // pred_fallthru
        _
    $region56: #{tpu_custom_call.1} parent=5 // pred_fallthru
      _
  $region6: #{tpu_custom_call.1} parent=0 // loop_footer
    %s17 = sadd.s32 1, %s13
  $region7: #{tpu_custom_call.1} parent=0 // loop_footer_branch
    %12 = sbr.rel target = $region3
  $region8: #{tpu_custom_call.1} parent=0 // loop_exit
    _

</llo_original>
